<compile_context>
chip_gen: v6e
topology: v6e:2x2x1
jax: 0.10.0
libtpu: 0.0.40
codegen_flags: <defaults>
</compile_context>

<pallas_src>
import math

import jax
import jax.numpy as jnp
from jax.experimental import pallas as pl
from jax.experimental.pallas import tpu as pltpu


# ---------------------------------------------------------------------------
# Kernel
# ---------------------------------------------------------------------------
def _ac_criterion_kernel(seq_ref, gts_ref, logp_ref, value_ref,
                         disc_ref, ltri_ref, mseg_ref, out_ref):
    """One (TBp, L) packed-batch tile -> one lane-dense (1, 128) partial row.

    Packed layout: each row of length L = S*T holds S original (length-T)
    caption rows ("segments"), so all elementwise work is lane-dense.  The
    per-sentence scans/sums are done on the MXU with constant 0/1 matrices.

    Partial-sum row layout:
      lane 0: sum(output)        lane 1: sum(mask)
      lane 2: sum(reward_diff)   lane 3: sum(per-position segment match count)
    """
    seq = seq_ref[...]                             # (TBp, L) int32
    gts = gts_ref[...]                             # (TBp, L) int32
    logp = logp_ref[...].astype(jnp.float32)       # bf16/f32 in HBM, f32 math
    value = value_ref[...].astype(jnp.float32)
    disc = disc_ref[...]                           # (1, L) f32: gamma**(i%T)/T
    ltri = ltri_ref[...]                           # (L, L) bf16: same-seg & j<=i
    mseg = mseg_ref[...]                           # (L, L) bf16: same-seg

    # --- EOS propagation (the PyTorch double loop): segmented inclusive
    # prefix count of zeros, computed on the (otherwise idle) MXU.
    is_zero = seq == 0
    cum_z = jnp.dot(is_zero.astype(jnp.bfloat16), ltri,
                    preferred_element_type=jnp.float32)    # zeros in seg[0..i]
    keep = cum_z == 0.0                                    # i <  first_zero
    mask = ((cum_z - is_zero.astype(jnp.float32)) == 0.0   # i <= first_zero
            ).astype(jnp.float32)
    zeroed = jnp.where(keep, seq, 0)

    # TODO(synk): utils.get_sample_reward_aic (AIC/CIDEr metric vs. gts_data)
    # has no Pallas equivalent; deterministic surrogate: per-sentence token
    # overlap with gts (on the EOS-zeroed sequence) discounted by gamma**t.
    match = (zeroed == gts).astype(jnp.bfloat16)
    cnt = jnp.dot(match, mseg, preferred_element_type=jnp.float32)  # (TBp, L)
    reward = cnt * disc                  # = (count / T) * gamma**t per position
    reward_diff = reward - value
    output = (-logp) * reward_diff * mask

    s_out = jnp.sum(output)
    s_mask = jnp.sum(mask)
    s_rd = jnp.sum(reward_diff)
    s_cnt = jnp.sum(cnt)                 # = T * sum of per-sentence match counts

    lane = jax.lax.broadcasted_iota(jnp.int32, (1, 128), 1)
    row = jnp.where(lane == 0, s_out, 0.0)
    row = jnp.where(lane == 1, s_mask, row)
    row = jnp.where(lane == 2, s_rd, row)
    row = jnp.where(lane == 3, s_cnt, row)
    out_ref[0, :, :] = row


# ---------------------------------------------------------------------------
# Wrapper helpers
# ---------------------------------------------------------------------------
def _packing(seq_len, max_lanes=1024):
    """Rows-per-packed-row S and packed width L = S * seq_len (lane-dense)."""
    L = math.lcm(seq_len, 128)
    if L > max_lanes:
        return 1, seq_len       # fall back: full-row blocks (still legal)
    return L // seq_len, L


def _pick_row_tile(R, bytes_per_row, max_block_bytes=6 << 20, min_rows=64):
    """Largest multiple-of-16 divisor of R within the byte budget, preferring
    >= 4 grid steps (v7x megacore + DMA pipelining) when blocks stay large."""
    cap = max(16, (max_block_bytes // max(bytes_per_row, 1)) // 16 * 16)
    limit = min(cap, R)
    if R // 4 >= min_rows:
        limit = min(limit, R // 4)
    best = 16
    for d in range(16, limit + 1, 16):
        if R % d == 0:
            best = d
    return best


# ---------------------------------------------------------------------------
# Public wrapper (forward pass of ActorCriticCriterionAIC)
# ---------------------------------------------------------------------------
def actor_critic_criterion_aic(sample_seq, sample_seqLogprobs, sample_value,
                               gts_data, gamma, vocab_size=None, *,
                               row_tile=None):
    """Returns (loss, reward_diff_mean, sample_mean), like the PyTorch module."""
    B, T = sample_seq.shape
    S, L = _packing(T)

    # Pad the batch so the packed row count R = B_pad // S is a multiple of 16
    # (sublane-aligned for both f32 and bf16 blocks).  Padded rows are built so
    # they contribute exactly +1 to sum(mask) and 0 to every other partial sum;
    # the wrapper corrects sum(mask) by n_pad below.
    group = 16 * S
    B_pad = -(-B // group) * group
    n_pad = B_pad - B

    seq = jnp.asarray(sample_seq, dtype=jnp.int32)
    gts = jnp.asarray(gts_data, dtype=jnp.int32)
    logp = jnp.asarray(sample_seqLogprobs)          # f32 or bf16, passed as-is
    value = jnp.asarray(sample_value)
    if n_pad:
        seq = jnp.pad(seq, ((0, n_pad), (0, 0)))                    # 0 tokens
        gts = jnp.pad(gts, ((0, n_pad), (0, 0)), constant_values=-1)
        logp = jnp.pad(logp, ((0, n_pad), (0, 0)))
        value = jnp.pad(value, ((0, n_pad), (0, 0)))

    # Free (metadata-only) reshape to the lane-dense packed layout.
    R = B_pad // S
    seq = seq.reshape(R, L)
    gts = gts.reshape(R, L)
    logp = logp.reshape(R, L)
    value = value.reshape(R, L)

    # Constants: discount row (1/T overlap normalisation folded in) and the two
    # segmented 0/1 matrices that drive the MXU reductions.
    pos = jnp.arange(L, dtype=jnp.int32)
    t_in_seg = (pos % T).astype(jnp.float32)
    disc = (jnp.float32(gamma) ** t_in_seg / jnp.float32(T))[None, :]   # (1, L)
    seg = pos // T
    same_seg = seg[:, None] == seg[None, :]
    ltri = (same_seg & (pos[:, None] <= pos[None, :])).astype(jnp.bfloat16)
    mseg = same_seg.astype(jnp.bfloat16)

    bytes_per_row = (seq.dtype.itemsize + gts.dtype.itemsize
                     + logp.dtype.itemsize + value.dtype.itemsize) * L
    TBp = row_tile if row_tile is not None else _pick_row_tile(R, bytes_per_row)
    assert R % TBp == 0 and (TBp % 16 == 0 or TBp == R), "bad row tile"
    G = R // TBp

    # Explicit VMEM budget: double-buffered big inputs + resident constants,
    # with 2x headroom, capped at 48 MiB (safe inside v7x's 64 MiB VMEM).
    need = (2 * TBp * bytes_per_row                    # 4 inputs, 2 buffers
            + 2 * (2 * L * L * 2 + L * 4)              # ltri + mseg + disc
            + 2 * 128 * 4)                             # output row
    vmem_limit = int(min(48 * 2 ** 20, max(4 * 2 ** 20, 2 * need)))

    partials = pl.pallas_call(
        _ac_criterion_kernel,
        out_shape=jax.ShapeDtypeStruct((G, 1, 128), jnp.float32),
        grid_spec=pltpu.PrefetchScalarGridSpec(
            num_scalar_prefetch=0,
            grid=(G,),
            in_specs=[
                pl.BlockSpec((TBp, L), lambda b: (b, 0)),   # sample_seq (packed)
                pl.BlockSpec((TBp, L), lambda b: (b, 0)),   # gts_data   (packed)
                pl.BlockSpec((TBp, L), lambda b: (b, 0)),   # seqLogprobs
                pl.BlockSpec((TBp, L), lambda b: (b, 0)),   # value
                pl.BlockSpec((1, L), lambda b: (0, 0)),     # disc  (resident)
                pl.BlockSpec((L, L), lambda b: (0, 0)),     # ltri  (resident)
                pl.BlockSpec((L, L), lambda b: (0, 0)),     # mseg  (resident)
            ],
            out_specs=pl.BlockSpec((1, 1, 128), lambda b: (b, 0, 0)),
        ),
        compiler_params=pltpu.CompilerParams(
            dimension_semantics=("parallel",),
            vmem_limit_bytes=vmem_limit,
        ),
    )(seq, gts, logp, value, disc, ltri, mseg)

    # Combine per-block partial sums; finish the divisions here so the grid
    # axis stays fully parallel (megacore-friendly).
    p = jnp.sum(partials[:, 0, :4], axis=0)            # (4,) totals
    loss = p[0] / (p[1] - jnp.float32(n_pad))           # masked mean
    rd_mean = p[2] / jnp.float32(B * T)                  # unmasked mean, as in ref
    sample_mean = p[3] / jnp.float32(B * T * T)
    return loss, rd_mean, sample_mean


# ---------------------------------------------------------------------------
# Pure-JAX reference (same surrogate reward) for the correctness check
# ---------------------------------------------------------------------------
def _reference(sample_seq, gts, logp, value, gamma):
    B, T = sample_seq.shape
    col = jnp.arange(T)[None, :]
    first_zero = jnp.min(jnp.where(sample_seq == 0, col, T), axis=-1,
                         keepdims=True)
    zeroed = jnp.where(col < first_zero, sample_seq, 0)
    mask = (col <= first_zero).astype(jnp.float32)
    overlap = jnp.mean((zeroed == gts).astype(jnp.float32), axis=1,
                       keepdims=True)
    reward = overlap * gamma ** jnp.arange(T, dtype=jnp.float32)[None, :]
    rd = reward - value.astype(jnp.float32)
    out = -logp.astype(jnp.float32) * rd * mask
    return out.sum() / mask.sum(), rd.mean(), overlap.mean()


if __name__ == "__main__":
    gamma = 0.95
    vocab_size = 10

    def _run_case(B, T, seed, row_tile=None, low_precision=False):
        key = jax.random.fold_in(jax.random.PRNGKey(0), seed)
        k_seq, k_logp, k_val, k_gts = jax.random.split(key, 4)
        seq = jax.random.randint(k_seq, (B, T), 0, vocab_size, dtype=jnp.int32)
        logp = -jnp.abs(jax.random.normal(k_logp, (B, T), jnp.float32))
        val = jax.random.normal(k_val, (B, T), jnp.float32) * 0.1
        gts = jax.random.randint(k_gts, (B, T), 0, vocab_size, dtype=jnp.int32)
        if low_precision:                      # v6e/v7x byte-shrink path
            logp = logp.astype(jnp.bfloat16)
            val = val.astype(jnp.bfloat16)

        loss, rd_mean, sample_mean = actor_critic_criterion_aic(
            seq, logp, val, gts, gamma, vocab_size, row_tile=row_tile)
        jax.block_until_ready((loss, rd_mean, sample_mean))

        ref_loss, ref_rd, ref_sm = _reference(seq, gts, logp, val, gamma)
        assert jnp.allclose(loss, ref_loss, atol=1e-4, rtol=1e-4)
        assert jnp.allclose(rd_mean, ref_rd, atol=1e-4, rtol=1e-4)
        assert jnp.allclose(sample_mean, ref_sm, atol=1e-4, rtol=1e-4)
        return loss, rd_mean, sample_mean

    # Case 1: module-scale example (B=2, T=8) — exercises the batch-pad path.
    loss, rd_mean, sample_mean = _run_case(B=2, T=8, seed=0)
    print('avg sample reward {:.3f}'.format(float(sample_mean)))

    # Case 2: multi-block grid (G=4) + parallel partial-sum combination.
    _run_case(B=512, T=16, seed=1, row_tile=16)

    # Case 3: bf16 logprobs/values straight from HBM (byte-shrink path).
    _run_case(B=48, T=16, seed=2, low_precision=True)

    print("KERNEL_OK")
</pallas_src>

<mosaic_0001>
module attributes {stable_mosaic.version = 11 : i64} {
  func.func @_ac_criterion_kernel(%arg0: i32, %arg1: memref<16x128xi32, #tpu.memory_space<vmem>>, %arg2: memref<16x128xi32, #tpu.memory_space<vmem>>, %arg3: memref<16x128xf32, #tpu.memory_space<vmem>>, %arg4: memref<16x128xf32, #tpu.memory_space<vmem>>, %arg5: memref<1x128xf32, #tpu.memory_space<vmem>>, %arg6: memref<128x128xbf16, #tpu.memory_space<vmem>>, %arg7: memref<128x128xbf16, #tpu.memory_space<vmem>>, %arg8: memref<1x1x128xf32, #tpu.memory_space<vmem>>) attributes {dimension_semantics = [#tpu.dimension_semantics<parallel>], iteration_bounds = array<i64: 1>, scalar_prefetch = 0 : i64, scratch_operands = 0 : i64, tpu.core_type = #tpu.core_type<tc>, window_params = [{transform_indices = @transform_0, window_bounds = array<i64: 16, 128>}, {transform_indices = @transform_1, window_bounds = array<i64: 16, 128>}, {transform_indices = @transform_2, window_bounds = array<i64: 16, 128>}, {transform_indices = @transform_3, window_bounds = array<i64: 16, 128>}, {pipeline_mode = #tpu.pipeline_mode<synchronous>, transform_indices = @transform_4, window_bounds = array<i64: 1, 128>}, {pipeline_mode = #tpu.pipeline_mode<synchronous>, transform_indices = @transform_5, window_bounds = array<i64: 128, 128>}, {pipeline_mode = #tpu.pipeline_mode<synchronous>, transform_indices = @transform_6, window_bounds = array<i64: 128, 128>}, {transform_indices = @transform_7, window_bounds = array<i64: 1, 1, 128>}]} {
    %c0 = arith.constant 0 : index
    %c0_0 = arith.constant 0 : index
    %0 = vector.load %arg1[%c0, %c0_0] : memref<16x128xi32, #tpu.memory_space<vmem>>, vector<16x128xi32>
    %c0_1 = arith.constant 0 : index
    %c0_2 = arith.constant 0 : index
    %1 = vector.load %arg2[%c0_1, %c0_2] : memref<16x128xi32, #tpu.memory_space<vmem>>, vector<16x128xi32>
    %c0_3 = arith.constant 0 : index
    %c0_4 = arith.constant 0 : index
    %2 = vector.load %arg3[%c0_3, %c0_4] : memref<16x128xf32, #tpu.memory_space<vmem>>, vector<16x128xf32>
    %c0_5 = arith.constant 0 : index
    %c0_6 = arith.constant 0 : index
    %3 = vector.load %arg4[%c0_5, %c0_6] : memref<16x128xf32, #tpu.memory_space<vmem>>, vector<16x128xf32>
    %c0_7 = arith.constant 0 : index
    %c0_8 = arith.constant 0 : index
    %4 = vector.load %arg5[%c0_7, %c0_8] : memref<1x128xf32, #tpu.memory_space<vmem>>, vector<1x128xf32>
    %c0_9 = arith.constant 0 : index
    %c0_10 = arith.constant 0 : index
    %5 = vector.load %arg6[%c0_9, %c0_10] : memref<128x128xbf16, #tpu.memory_space<vmem>>, vector<128x128xbf16>
    %c0_11 = arith.constant 0 : index
    %c0_12 = arith.constant 0 : index
    %6 = vector.load %arg7[%c0_11, %c0_12] : memref<128x128xbf16, #tpu.memory_space<vmem>>, vector<128x128xbf16>
    %c0_i32 = arith.constant 0 : i32
    %7 = vector.broadcast %c0_i32 : i32 to vector<16x128xi32>
    %8 = arith.cmpi eq, %0, %7 : vector<16x128xi32>
    %9 = arith.extui %8 : vector<16x128xi1> to vector<16x128xi32>
    %10 = arith.sitofp %9 : vector<16x128xi32> to vector<16x128xf32>
    %11 = arith.truncf %10 : vector<16x128xf32> to vector<16x128xbf16>
    %cst = arith.constant dense<0.000000e+00> : vector<16x128xf32>
    %12 = tpu.matmul %11, %5, %cst {dimension_numbers = #tpu.dot_dimension_numbers<[1], [0], [0], [1], [0, 0, 1, 1], [], []>} : vector<16x128xbf16>, vector<128x128xbf16>, vector<16x128xf32> -> vector<16x128xf32>
    %cst_13 = arith.constant 0.000000e+00 : f32
    %13 = vector.broadcast %cst_13 : f32 to vector<16x128xf32>
    %14 = arith.cmpf oeq, %12, %13 : vector<16x128xf32>
    %15 = arith.extui %8 : vector<16x128xi1> to vector<16x128xi32>
    %16 = arith.sitofp %15 : vector<16x128xi32> to vector<16x128xf32>
    %17 = arith.subf %12, %16 : vector<16x128xf32>
    %cst_14 = arith.constant 0.000000e+00 : f32
    %18 = vector.broadcast %cst_14 : f32 to vector<16x128xf32>
    %19 = arith.cmpf oeq, %17, %18 : vector<16x128xf32>
    %20 = arith.extui %19 : vector<16x128xi1> to vector<16x128xi32>
    %21 = arith.sitofp %20 : vector<16x128xi32> to vector<16x128xf32>
    %c0_i32_15 = arith.constant 0 : i32
    %22 = vector.broadcast %c0_i32_15 : i32 to vector<16x128xi32>
    %23 = arith.select %14, %0, %22 : vector<16x128xi1>, vector<16x128xi32>
    %24 = arith.cmpi eq, %23, %1 : vector<16x128xi32>
    %25 = arith.extui %24 : vector<16x128xi1> to vector<16x128xi32>
    %26 = arith.sitofp %25 : vector<16x128xi32> to vector<16x128xf32>
    %27 = arith.truncf %26 : vector<16x128xf32> to vector<16x128xbf16>
    %cst_16 = arith.constant dense<0.000000e+00> : vector<16x128xf32>
    %28 = tpu.matmul %27, %6, %cst_16 {dimension_numbers = #tpu.dot_dimension_numbers<[1], [0], [0], [1], [0, 0, 1, 1], [], []>} : vector<16x128xbf16>, vector<128x128xbf16>, vector<16x128xf32> -> vector<16x128xf32>
    %29 = vector.broadcast %4 : vector<1x128xf32> to vector<16x128xf32>
    %30 = arith.mulf %28, %29 : vector<16x128xf32>
    %31 = arith.subf %30, %3 : vector<16x128xf32>
    %cst_17 = arith.constant 0.000000e+00 : f32
    %32 = vector.broadcast %cst_17 : f32 to vector<16x128xf32>
    %33 = arith.subf %32, %2 : vector<16x128xf32>
    %34 = arith.mulf %33, %31 : vector<16x128xf32>
    %35 = arith.mulf %34, %21 : vector<16x128xf32>
    %36 = vector.shape_cast %35 : vector<16x128xf32> to vector<1x16x128xf32>
    %cst_18 = arith.constant dense<0.000000e+00> : vector<1xf32>
    %37 = vector.multi_reduction <add>, %36, %cst_18 [1, 2] : vector<1x16x128xf32> to vector<1xf32>
    %38 = vector.shape_cast %37 : vector<1xf32> to vector<1x1x1xf32>
    %39 = vector.extract %38[0, 0, 0] : f32 from vector<1x1x1xf32>
    %40 = vector.shape_cast %21 : vector<16x128xf32> to vector<1x16x128xf32>
    %cst_19 = arith.constant dense<0.000000e+00> : vector<1xf32>
    %41 = vector.multi_reduction <add>, %40, %cst_19 [1, 2] : vector<1x16x128xf32> to vector<1xf32>
    %42 = vector.shape_cast %41 : vector<1xf32> to vector<1x1x1xf32>
    %43 = vector.extract %42[0, 0, 0] : f32 from vector<1x1x1xf32>
    %44 = vector.shape_cast %31 : vector<16x128xf32> to vector<1x16x128xf32>
    %cst_20 = arith.constant dense<0.000000e+00> : vector<1xf32>
    %45 = vector.multi_reduction <add>, %44, %cst_20 [1, 2] : vector<1x16x128xf32> to vector<1xf32>
    %46 = vector.shape_cast %45 : vector<1xf32> to vector<1x1x1xf32>
    %47 = vector.extract %46[0, 0, 0] : f32 from vector<1x1x1xf32>
    %48 = vector.shape_cast %28 : vector<16x128xf32> to vector<1x16x128xf32>
    %cst_21 = arith.constant dense<0.000000e+00> : vector<1xf32>
    %49 = vector.multi_reduction <add>, %48, %cst_21 [1, 2] : vector<1x16x128xf32> to vector<1xf32>
    %50 = vector.shape_cast %49 : vector<1xf32> to vector<1x1x1xf32>
    %51 = vector.extract %50[0, 0, 0] : f32 from vector<1x1x1xf32>
    %52 = tpu.iota {dimensions = array<i32: 1>} : vector<1x128xi32>
    %c0_i32_22 = arith.constant 0 : i32
    %53 = vector.broadcast %c0_i32_22 : i32 to vector<1x128xi32>
    %54 = arith.cmpi eq, %52, %53 : vector<1x128xi32>
    %cst_23 = arith.constant 0.000000e+00 : f32
    %55 = vector.broadcast %39 : f32 to vector<1x128xf32>
    %56 = vector.broadcast %cst_23 : f32 to vector<1x128xf32>
    %57 = arith.select %54, %55, %56 : vector<1x128xi1>, vector<1x128xf32>
    %c1_i32 = arith.constant 1 : i32
    %58 = vector.broadcast %c1_i32 : i32 to vector<1x128xi32>
    %59 = arith.cmpi eq, %52, %58 : vector<1x128xi32>
    %60 = vector.broadcast %43 : f32 to vector<1x128xf32>
    %61 = arith.select %59, %60, %57 : vector<1x128xi1>, vector<1x128xf32>
    %c2_i32 = arith.constant 2 : i32
    %62 = vector.broadcast %c2_i32 : i32 to vector<1x128xi32>
    %63 = arith.cmpi eq, %52, %62 : vector<1x128xi32>
    %64 = vector.broadcast %47 : f32 to vector<1x128xf32>
    %65 = arith.select %63, %64, %61 : vector<1x128xi1>, vector<1x128xf32>
    %c3_i32 = arith.constant 3 : i32
    %66 = vector.broadcast %c3_i32 : i32 to vector<1x128xi32>
    %67 = arith.cmpi eq, %52, %66 : vector<1x128xi32>
    %68 = vector.broadcast %51 : f32 to vector<1x128xf32>
    %69 = arith.select %67, %68, %65 : vector<1x128xi1>, vector<1x128xf32>
    %c0_24 = arith.constant 0 : index
    %c0_25 = arith.constant 0 : index
    %c0_26 = arith.constant 0 : index
    %70 = vector.load %arg8[%c0_24, %c0_25, %c0_26] : memref<1x1x128xf32, #tpu.memory_space<vmem>>, vector<1x1x128xf32>
    %71 = vector.shape_cast %70 : vector<1x1x128xf32> to vector<1x128xf32>
    %72 = vector.shape_cast %69 : vector<1x128xf32> to vector<1x1x128xf32>
    tpu.vector_store %arg8[%c0_24, %c0_25, %c0_26], %72 {strides = array<i32>} : memref<1x1x128xf32, #tpu.memory_space<vmem>>, vector<1x1x128xf32>,
    return
  }
  func.func @transform_0(%arg0: i32) -> (i32, i32) {
    %c0_i32 = arith.constant 0 : i32
    %c0_i32_0 = arith.constant 0 : i32
    return %arg0, %c0_i32 : i32, i32
  }
  func.func @transform_1(%arg0: i32) -> (i32, i32) {
    %c0_i32 = arith.constant 0 : i32
    %c0_i32_0 = arith.constant 0 : i32
    return %arg0, %c0_i32 : i32, i32
  }
  func.func @transform_2(%arg0: i32) -> (i32, i32) {
    %c0_i32 = arith.constant 0 : i32
    %c0_i32_0 = arith.constant 0 : i32
    return %arg0, %c0_i32 : i32, i32
  }
  func.func @transform_3(%arg0: i32) -> (i32, i32) {
    %c0_i32 = arith.constant 0 : i32
    %c0_i32_0 = arith.constant 0 : i32
    return %arg0, %c0_i32 : i32, i32
  }
  func.func @transform_4(%arg0: i32) -> (i32, i32) {
    %c0_i32 = arith.constant 0 : i32
    %c0_i32_0 = arith.constant 0 : i32
    %c0_i32_1 = arith.constant 0 : i32
    return %c0_i32, %c0_i32_0 : i32, i32
  }
  func.func @transform_5(%arg0: i32) -> (i32, i32) {
    %c0_i32 = arith.constant 0 : i32
    %c0_i32_0 = arith.constant 0 : i32
    %c0_i32_1 = arith.constant 0 : i32
    return %c0_i32, %c0_i32_0 : i32, i32
  }
  func.func @transform_6(%arg0: i32) -> (i32, i32) {
    %c0_i32 = arith.constant 0 : i32
    %c0_i32_0 = arith.constant 0 : i32
    %c0_i32_1 = arith.constant 0 : i32
    return %c0_i32, %c0_i32_0 : i32, i32
  }
  func.func @transform_7(%arg0: i32) -> (i32, i32, i32) {
    %c0_i32 = arith.constant 0 : i32
    %c0_i32_0 = arith.constant 0 : i32
    %c0_i32_1 = arith.constant 0 : i32
    return %arg0, %c0_i32, %c0_i32_0 : i32, i32, i32
  }
}

</mosaic_0001>

<llo_original>
// kernel: tpu_custom_call.1
$region0: #{tpu_custom_call.1}
  #allocation0 [shape = 'u32[]', space=smem, size = 0x4, offset = 0x4, fixed_abs, tag = 'smem constant byte address 0x4 - core index']
  #allocation1 [shape = 'u32[144,128]{1,0:T(1,128)}', space=vmem, size = 0x12000, scoped, tag = 'internal scratch']
  %s0 = inlined_call_operand.hbm [shape: s32[16,128], index: 0, kind: input, shape index: {}]
  %s1 = inlined_call_operand.hbm [shape: s32[16,128], index: 1, kind: input, shape index: {}]
  %s2 = inlined_call_operand.hbm [shape: f32[16,128], index: 2, kind: input, shape index: {}]
  %s3 = inlined_call_operand.hbm [shape: f32[16,128], index: 3, kind: input, shape index: {}]
  %s4 = inlined_call_operand.vmem [shape: f32[1,128], index: 4, kind: input, shape index: {}]
  %s5 = inlined_call_operand.hbm [shape: bf16[128,128], index: 5, kind: input, shape index: {}]
  %s6 = inlined_call_operand.hbm [shape: bf16[128,128], index: 6, kind: input, shape index: {}]
  %s7 = inlined_call_operand.hbm [shape: f32[1,1,128], index: 7, kind: output, shape index: {}]
  %s8 = sld [smem:[#allocation0]]
  $region62: #{tpu_custom_call.1} parent=0
    _
  %s10 = ssub.s32 1, %s8
  %s11 = scalar_select 0, %s10, %s8
  $region1: #{tpu_custom_call.1} parent=0
    #allocation2 [shape = 'u8[8192]{0}', space=vmem, size = 0x2000, scoped, tag = 'input window, operand 0, single buffered']
    #allocation3 [shape = 's32[1]{0}', space=sflag, size = 0x4, scoped, tag = 'scoped memory for tpu_custom_call.1']
    #allocation4 [shape = 's32[1]{0}', space=sflag, size = 0x4, scoped, tag = 'scoped memory for tpu_custom_call.1']
    #allocation5 [shape = 'u8[8192]{0}', space=vmem, size = 0x2000, scoped, tag = 'input window, operand 1, single buffered']
    #allocation6 [shape = 's32[1]{0}', space=sflag, size = 0x4, scoped, tag = 'scoped memory for tpu_custom_call.1']
    #allocation7 [shape = 'u8[8192]{0}', space=vmem, size = 0x2000, scoped, tag = 'input window, operand 2, single buffered']
    #allocation8 [shape = 'u8[8192]{0}', space=vmem, size = 0x2000, scoped, tag = 'input window, operand 3, single buffered']
    #allocation9 [shape = 's32[1]{0}', space=sflag, size = 0x4, scoped, tag = 'scoped memory for tpu_custom_call.1']
    #allocation10 [shape = 'u8[32768]{0}', space=vmem, size = 0x8000, scoped, tag = 'input window, operand 5, single buffered']
    #allocation11 [shape = 'u8[32768]{0}', space=vmem, size = 0x8000, scoped, tag = 'input window, operand 6, single buffered']
    #allocation12 [shape = 's32[1]{0}', space=sflag, size = 0x4, scoped, tag = 'scoped memory for tpu_custom_call.1']
    #allocation13 [shape = 'u8[512]{0}', space=vmem, size = 0x400, scoped, tag = 'output window, operand 0, single buffered']
    %12 = vsyncpa [#allocation3], 0
    %13 = vsyncpa [#allocation6], 0
    %14 = vsyncpa [#allocation9], 0
    %15 = vsyncpa [#allocation12], 0
    %16 = vsyncpa [#allocation4], 0
    // Predicated region
    $region2: #{tpu_custom_call.1} parent=1 // pred_check
      _
    $region3: #{tpu_custom_call.1} parent=1 // pred_check_branch
      %18 = sbr.rel (0) target = $region5
    $region4: #{tpu_custom_call.1} parent=1 // pred_region
      %s20 = ssub.s32 256, 256
      %21 = vsyncadd [#allocation3], %s20
      %s22 = sshll.u32 [#allocation2], 4
      %s23 = int_to_ptr.vmem [resolvable:$true] %s22
      %28 = dma.hbm_to_vmem [thread:$0]  %s0, 256, %s23, [#allocation3], 128, 128, 8
    $region5: #{tpu_custom_call.1} parent=1 // pred_fallthru
      _
    // Predicated region
    $region6: #{tpu_custom_call.1} parent=1 // pred_check
      _
    $region7: #{tpu_custom_call.1} parent=1 // pred_check_branch
      %30 = sbr.rel (0) target = $region9
    $region8: #{tpu_custom_call.1} parent=1 // pred_region
      %s32 = ssub.s32 256, 256
      %33 = vsyncadd [#allocation6], %s32
      %s34 = sshll.u32 [#allocation5], 4
      %s35 = int_to_ptr.vmem [resolvable:$true] %s34
      %40 = dma.hbm_to_vmem [thread:$0]  %s1, 256, %s35, [#allocation6], 128, 128, 8
    $region9: #{tpu_custom_call.1} parent=1 // pred_fallthru
      _
    // Predicated region
    $region10: #{tpu_custom_call.1} parent=1 // pred_check
      _
    $region11: #{tpu_custom_call.1} parent=1 // pred_check_branch
      %42 = sbr.rel (0) target = $region13
    $region12: #{tpu_custom_call.1} parent=1 // pred_region
      %s44 = ssub.s32 256, 256
      %45 = vsyncadd [#allocation6], %s44
      %s46 = sshll.u32 [#allocation7], 4
      %s47 = int_to_ptr.vmem [resolvable:$true] %s46
      %52 = dma.hbm_to_vmem [thread:$0]  %s2, 256, %s47, [#allocation6], 128, 128, 8
    $region13: #{tpu_custom_call.1} parent=1 // pred_fallthru
      _
    // Predicated region
    $region14: #{tpu_custom_call.1} parent=1 // pred_check
      _
    $region15: #{tpu_custom_call.1} parent=1 // pred_check_branch
      %54 = sbr.rel (0) target = $region17
    $region16: #{tpu_custom_call.1} parent=1 // pred_region
      %s56 = ssub.s32 256, 256
      %57 = vsyncadd [#allocation9], %s56
      %s58 = sshll.u32 [#allocation8], 4
      %s59 = int_to_ptr.vmem [resolvable:$true] %s58
      %64 = dma.hbm_to_vmem [thread:$0]  %s3, 256, %s59, [#allocation9], 128, 128, 8
    $region17: #{tpu_custom_call.1} parent=1 // pred_fallthru
      _
    // Predicated region
    $region18: #{tpu_custom_call.1} parent=1 // pred_check
      _
    $region19: #{tpu_custom_call.1} parent=1 // pred_check_branch
      %66 = sbr.rel (0) target = $region21
    $region20: #{tpu_custom_call.1} parent=1 // pred_region
      _
    $region21: #{tpu_custom_call.1} parent=1 // pred_fallthru
      _
    // Predicated region
    $region22: #{tpu_custom_call.1} parent=1 // pred_check
      _
    $region23: #{tpu_custom_call.1} parent=1 // pred_check_branch
      %68 = sbr.rel (0) target = $region25
    $region24: #{tpu_custom_call.1} parent=1 // pred_region
      %s70 = ssub.s32 1024, 1024
      %71 = vsyncadd [#allocation9], %s70
      %s72 = sshll.u32 [#allocation10], 4
      %s73 = int_to_ptr.vmem [resolvable:$true] %s72
      %78 = dma.hbm_to_vmem [thread:$0]  %s5, 1024, %s73, [#allocation9], 64, 64, 4
    $region25: #{tpu_custom_call.1} parent=1 // pred_fallthru
      _
    // Predicated region
    $region26: #{tpu_custom_call.1} parent=1 // pred_check
      _
    $region27: #{tpu_custom_call.1} parent=1 // pred_check_branch
      %80 = sbr.rel (0) target = $region29
    $region28: #{tpu_custom_call.1} parent=1 // pred_region
      %s82 = ssub.s32 1024, 1024
      %83 = vsyncadd [#allocation12], %s82
      %s84 = sshll.u32 [#allocation11], 4
      %s85 = int_to_ptr.vmem [resolvable:$true] %s84
      %90 = dma.hbm_to_vmem [thread:$0]  %s6, 1024, %s85, [#allocation12], 64, 64, 4
    $region29: #{tpu_custom_call.1} parent=1 // pred_fallthru
      _
    // Predicated region
    $region30: #{tpu_custom_call.1} parent=1 // pred_check
      _
    $region31: #{tpu_custom_call.1} parent=1 // pred_check_branch
      %92 = sbr.rel (0) target = $region33
    $region32: #{tpu_custom_call.1} parent=1 // pred_region
      %93 = dma.done [#allocation3], 256
    $region33: #{tpu_custom_call.1} parent=1 // pred_fallthru
      _
    // Predicated region
    $region34: #{tpu_custom_call.1} parent=1 // pred_check
      _
    $region35: #{tpu_custom_call.1} parent=1 // pred_check_branch
      %95 = sbr.rel (0) target = $region37
    $region36: #{tpu_custom_call.1} parent=1 // pred_region
      %96 = dma.done [#allocation6], 256
    $region37: #{tpu_custom_call.1} parent=1 // pred_fallthru
      _
    // Predicated region
    $region38: #{tpu_custom_call.1} parent=1 // pred_check
      _
    $region39: #{tpu_custom_call.1} parent=1 // pred_check_branch
      %98 = sbr.rel (0) target = $region41
    $region40: #{tpu_custom_call.1} parent=1 // pred_region
      %99 = dma.done [#allocation6], 256
    $region41: #{tpu_custom_call.1} parent=1 // pred_fallthru
      _
    // Predicated region
    $region42: #{tpu_custom_call.1} parent=1 // pred_check
      _
    $region43: #{tpu_custom_call.1} parent=1 // pred_check_branch
      %101 = sbr.rel (0) target = $region45
    $region44: #{tpu_custom_call.1} parent=1 // pred_region
      %102 = dma.done [#allocation9], 256
    $region45: #{tpu_custom_call.1} parent=1 // pred_fallthru
      _
    // Predicated region
    $region46: #{tpu_custom_call.1} parent=1 // pred_check
      _
    $region47: #{tpu_custom_call.1} parent=1 // pred_check_branch
      %104 = sbr.rel (0) target = $region49
    $region48: #{tpu_custom_call.1} parent=1 // pred_region
      %105 = dma.done [#allocation9], 1024
    $region49: #{tpu_custom_call.1} parent=1 // pred_fallthru
      _
    // Predicated region
    $region50: #{tpu_custom_call.1} parent=1 // pred_check
      _
    $region51: #{tpu_custom_call.1} parent=1 // pred_check_branch
      %107 = sbr.rel (0) target = $region53
    $region52: #{tpu_custom_call.1} parent=1 // pred_region
      %108 = dma.done [#allocation12], 1024
    $region53: #{tpu_custom_call.1} parent=1 // pred_fallthru
      _
    %v110 = vld [vmem:[#allocation2] sm:$0xff]
    %v111 = vld [vmem:[#allocation2 + $0x8] sm:$0xff]
    %v112 = vld [vmem:[#allocation5] sm:$0xff]
    %v113 = vld [vmem:[#allocation5 + $0x8] sm:$0xff]
    %v114 = vld [vmem:[#allocation7] sm:$0xff]
    %v115 = vld [vmem:[#allocation7 + $0x8] sm:$0xff]
    %v116 = vld [vmem:[#allocation8] sm:$0xff]
    %v117 = vld [vmem:[#allocation8 + $0x8] sm:$0xff]
    %v118 = vld [vmem:[%s4] sm:$0x1]
    %v119 = vld [vmem:[#allocation10] sm:$0xf]
    %v120 = vld [vmem:[#allocation10 + $0x4] sm:$0xf]
    %v121 = vld [vmem:[#allocation10 + $0x8] sm:$0xf]
    %v122 = vld [vmem:[#allocation10 + $0xc] sm:$0xf]
    %v123 = vld [vmem:[#allocation10 + $0x10] sm:$0xf]
    %v124 = vld [vmem:[#allocation10 + $0x14] sm:$0xf]
    %v125 = vld [vmem:[#allocation10 + $0x18] sm:$0xf]
    %v126 = vld [vmem:[#allocation10 + $0x1c] sm:$0xf]
    %v127 = vld [vmem:[#allocation10 + $0x20] sm:$0xf]
    %v128 = vld [vmem:[#allocation10 + $0x24] sm:$0xf]
    %v129 = vld [vmem:[#allocation10 + $0x28] sm:$0xf]
    %v130 = vld [vmem:[#allocation10 + $0x2c] sm:$0xf]
    %v131 = vld [vmem:[#allocation10 + $0x30] sm:$0xf]
    %v132 = vld [vmem:[#allocation10 + $0x34] sm:$0xf]
    %v133 = vld [vmem:[#allocation10 + $0x38] sm:$0xf]
    %v134 = vld [vmem:[#allocation10 + $0x3c] sm:$0xf]
    %v135 = vld [vmem:[#allocation11] sm:$0xf]
    %v136 = vld [vmem:[#allocation11 + $0x4] sm:$0xf]
    %v137 = vld [vmem:[#allocation11 + $0x8] sm:$0xf]
    %v138 = vld [vmem:[#allocation11 + $0xc] sm:$0xf]
    %v139 = vld [vmem:[#allocation11 + $0x10] sm:$0xf]
    %v140 = vld [vmem:[#allocation11 + $0x14] sm:$0xf]
    %v141 = vld [vmem:[#allocation11 + $0x18] sm:$0xf]
    %v142 = vld [vmem:[#allocation11 + $0x1c] sm:$0xf]
    %v143 = vld [vmem:[#allocation11 + $0x20] sm:$0xf]
    %v144 = vld [vmem:[#allocation11 + $0x24] sm:$0xf]
    %v145 = vld [vmem:[#allocation11 + $0x28] sm:$0xf]
    %v146 = vld [vmem:[#allocation11 + $0x2c] sm:$0xf]
    %v147 = vld [vmem:[#allocation11 + $0x30] sm:$0xf]
    %v148 = vld [vmem:[#allocation11 + $0x34] sm:$0xf]
    %v149 = vld [vmem:[#allocation11 + $0x38] sm:$0xf]
    %v150 = vld [vmem:[#allocation11 + $0x3c] sm:$0xf]
    %vm151 = vcmp.eq.s32.totalorder %v110, 0
    %vm152 = vcmp.eq.s32.totalorder %v111, 0
    %v153 = vsel %vm151, 1, 0
    %v154 = vsel %vm152, 1, 0
    %v155 = vcvt.s32.f32 %v153
    %v156 = vcvt.s32.f32 %v154
    %v157 = vpack.c.bf16 %v156, %v155
    %v174 = vunpack.c.l.b16 %v119
    %v175 = vunpack.c.l.b16 %v120
    %v176 = vunpack.c.l.b16 %v121
    %v177 = vunpack.c.l.b16 %v122
    %v178 = vunpack.c.l.b16 %v123
    %v179 = vunpack.c.l.b16 %v124
    %v180 = vunpack.c.l.b16 %v125
    %v181 = vunpack.c.l.b16 %v126
    %v182 = vunpack.c.l.b16 %v127
    %v183 = vunpack.c.l.b16 %v128
    %v184 = vunpack.c.l.b16 %v129
    %v185 = vunpack.c.l.b16 %v130
    %v186 = vunpack.c.l.b16 %v131
    %v187 = vunpack.c.l.b16 %v132
    %v188 = vunpack.c.l.b16 %v133
    %v189 = vunpack.c.l.b16 %v134
    %v190 = vpack.c.b16 %v175, %v174
    %v191 = vpack.c.b16 %v177, %v176
    %v192 = vpack.c.b16 %v179, %v178
    %v193 = vpack.c.b16 %v181, %v180
    %v194 = vpack.c.b16 %v183, %v182
    %v195 = vpack.c.b16 %v185, %v184
    %v196 = vpack.c.b16 %v187, %v186
    %v197 = vpack.c.b16 %v189, %v188
    %206 = vmatprep.subr.bf16.mxu0 0
    %207 = vmatpush1.bf16.msra.mxu0 %v197
    %208 = vmatprep.subr.bf16.mxu0 0
    %209 = vmatpush1.bf16.msra.mxu0 %v196
    %210 = vmatprep.subr.bf16.mxu0 0
    %211 = vmatpush1.bf16.msra.mxu0 %v195
    %212 = vmatprep.subr.bf16.mxu0 0
    %213 = vmatpush1.bf16.msra.mxu0 %v194
    %214 = vmatprep.subr.bf16.mxu0 0
    %215 = vmatpush1.bf16.msra.mxu0 %v193
    %216 = vmatprep.subr.bf16.mxu0 0
    %217 = vmatpush1.bf16.msra.mxu0 %v192
    %218 = vmatprep.subr.bf16.mxu0 0
    %219 = vmatpush1.bf16.msra.mxu0 %v191
    %220 = vmatprep.subr.bf16.mxu0 0
    %221 = vmatpush1.bf16.msra.mxu0 %v190
    %222 = vmatprep.subr.bf16.mxu0 0
    %223 = vmatpush2.bf16.msra.mxu0 0
    %224 = vmatprep.subr.bf16.mxu0 0
    %225 = vmatpush2.bf16.msra.mxu0 0
    %226 = vmatprep.subr.bf16.mxu0 0
    %227 = vmatpush2.bf16.msra.mxu0 0
    %228 = vmatprep.subr.bf16.mxu0 0
    %229 = vmatpush2.bf16.msra.mxu0 0
    %230 = vmatprep.subr.bf16.mxu0 0
    %231 = vmatpush2.bf16.msra.mxu0 0
    %232 = vmatprep.subr.bf16.mxu0 0
    %233 = vmatpush2.bf16.msra.mxu0 0
    %234 = vmatprep.subr.bf16.mxu0 0
    %235 = vmatpush2.bf16.msra.mxu0 0
    %236 = vmatprep.subr.bf16.mxu0 0
    %237 = vmatpush2.bf16.msra.mxu0 0
    %238 = vmatprep.mubr.bf16.mxu0 0
    %239 = vmatmul.mubr.bf16.gmra.mxu0 %v157
    %v240 = vpop.f32.mrf.mxu0
    %v241 = vadd.f32 0.0, %v240
    %v242 = vpop.f32.mrf.mxu0
    %v243 = vpop.f32.mrf.mxu0
    %v244 = vadd.f32 0.0, %v243
    %v245 = vpop.f32.mrf.mxu0
    %246 = vdwg.mxu0
    %vm247 = vcmp.eq.f32.partialorder %v241, 0.0
    %vm248 = vcmp.eq.f32.partialorder %v244, 0.0
    %v249 = vsub.f32 %v241, %v155
    %v250 = vsub.f32 %v244, %v156
    %vm251 = vcmp.eq.f32.partialorder %v249, 0.0
    %vm252 = vcmp.eq.f32.partialorder %v250, 0.0
    %v253 = vsel %vm251, 1, 0
    %v254 = vsel %vm252, 1, 0
    %v255 = vcvt.s32.f32 %v253
    %v256 = vcvt.s32.f32 %v254
    %v257 = vsel %vm247, %v110, 0
    %v258 = vsel %vm248, %v111, 0
    %vm259 = vcmp.eq.s32.totalorder %v257, %v112
    %vm260 = vcmp.eq.s32.totalorder %v258, %v113
    %v261 = vsel %vm259, 1, 0
    %v262 = vsel %vm260, 1, 0
    %v263 = vcvt.s32.f32 %v261
    %v264 = vcvt.s32.f32 %v262
    %v265 = vpack.c.bf16 %v264, %v263
    %v282 = vunpack.c.l.b16 %v135
    %v283 = vunpack.c.l.b16 %v136
    %v284 = vunpack.c.l.b16 %v137
    %v285 = vunpack.c.l.b16 %v138
    %v286 = vunpack.c.l.b16 %v139
    %v287 = vunpack.c.l.b16 %v140
    %v288 = vunpack.c.l.b16 %v141
    %v289 = vunpack.c.l.b16 %v142
    %v290 = vunpack.c.l.b16 %v143
    %v291 = vunpack.c.l.b16 %v144
    %v292 = vunpack.c.l.b16 %v145
    %v293 = vunpack.c.l.b16 %v146
    %v294 = vunpack.c.l.b16 %v147
    %v295 = vunpack.c.l.b16 %v148
    %v296 = vunpack.c.l.b16 %v149
    %v297 = vunpack.c.l.b16 %v150
    %v298 = vpack.c.b16 %v283, %v282
    %v299 = vpack.c.b16 %v285, %v284
    %v300 = vpack.c.b16 %v287, %v286
    %v301 = vpack.c.b16 %v289, %v288
    %v302 = vpack.c.b16 %v291, %v290
    %v303 = vpack.c.b16 %v293, %v292
    %v304 = vpack.c.b16 %v295, %v294
    %v305 = vpack.c.b16 %v297, %v296
    %314 = vmatprep.subr.bf16.mxu0 0
    %315 = vmatpush1.bf16.msra.mxu0 %v305
    %316 = vmatprep.subr.bf16.mxu0 0
    %317 = vmatpush1.bf16.msra.mxu0 %v304
    %318 = vmatprep.subr.bf16.mxu0 0
    %319 = vmatpush1.bf16.msra.mxu0 %v303
    %320 = vmatprep.subr.bf16.mxu0 0
    %321 = vmatpush1.bf16.msra.mxu0 %v302
    %322 = vmatprep.subr.bf16.mxu0 0
    %323 = vmatpush1.bf16.msra.mxu0 %v301
    %324 = vmatprep.subr.bf16.mxu0 0
    %325 = vmatpush1.bf16.msra.mxu0 %v300
    %326 = vmatprep.subr.bf16.mxu0 0
    %327 = vmatpush1.bf16.msra.mxu0 %v299
    %328 = vmatprep.subr.bf16.mxu0 0
    %329 = vmatpush1.bf16.msra.mxu0 %v298
    %330 = vmatprep.subr.bf16.mxu0 0
    %331 = vmatpush2.bf16.msra.mxu0 0
    %332 = vmatprep.subr.bf16.mxu0 0
    %333 = vmatpush2.bf16.msra.mxu0 0
    %334 = vmatprep.subr.bf16.mxu0 0
    %335 = vmatpush2.bf16.msra.mxu0 0
    %336 = vmatprep.subr.bf16.mxu0 0
    %337 = vmatpush2.bf16.msra.mxu0 0
    %338 = vmatprep.subr.bf16.mxu0 0
    %339 = vmatpush2.bf16.msra.mxu0 0
    %340 = vmatprep.subr.bf16.mxu0 0
    %341 = vmatpush2.bf16.msra.mxu0 0
    %342 = vmatprep.subr.bf16.mxu0 0
    %343 = vmatpush2.bf16.msra.mxu0 0
    %344 = vmatprep.subr.bf16.mxu0 0
    %345 = vmatpush2.bf16.msra.mxu0 0
    %346 = vmatprep.mubr.bf16.mxu0 0
    %347 = vmatmul.mubr.bf16.gmra.mxu0 %v265
    %v348 = vpop.f32.mrf.mxu0
    %v349 = vadd.f32 0.0, %v348
    %v350 = vpop.f32.mrf.mxu0
    %v351 = vpop.f32.mrf.mxu0
    %v352 = vadd.f32 0.0, %v351
    %v353 = vpop.f32.mrf.mxu0
    %354 = vdwg.mxu0
    %v356 = vlaneseq
    %v357 = vshrl.u32 %v356, 7
    %v358 = vsub.s32 0, %v357
    %v359 = vrot.slane %v118, %v358
    %v361 = vmul.f32 %v349, %v359
    %v362 = vmul.f32 %v352, %v359
    %v363 = vsub.f32 %v361, %v116
    %v364 = vsub.f32 %v362, %v117
    %v365 = vsub.f32 0.0, %v114
    %v366 = vsub.f32 0.0, %v115
    %v367 = vmul.f32 %v365, %v363
    %v368 = vmul.f32 %v366, %v364
    %v369 = vmul.f32 %v367, %v255
    %v370 = vmul.f32 %v368, %v256
    %v371 = vadd.f32 %v369, %v370
    %372 = vadd.xlane.f32.xlu0 %v371
    %v373 = vpop.xlane.xlu0 %372
    %v374 = vrot.slane %v373, 4
    %v375 = vadd.f32 %v373, %v374
    %v376 = vrot.slane %v375, 2
    %v377 = vadd.f32 %v375, %v376
    %v378 = vrot.slane %v377, 1
    %v379 = vadd.f32 %v377, %v378
    %s380 = vtos %v379
    %v381 = vadd.f32 %v255, %v256
    %382 = vadd.xlane.f32.xlu0 %v381
    %v383 = vpop.xlane.xlu0 %382
    %v384 = vrot.slane %v383, 4
    %v385 = vadd.f32 %v383, %v384
    %v386 = vrot.slane %v385, 2
    %v387 = vadd.f32 %v385, %v386
    %v388 = vrot.slane %v387, 1
    %v389 = vadd.f32 %v387, %v388
    %s390 = vtos %v389
    %v391 = vadd.f32 %v363, %v364
    %392 = vadd.xlane.f32.xlu0 %v391
    %v393 = vpop.xlane.xlu0 %392
    %v394 = vrot.slane %v393, 4
    %v395 = vadd.f32 %v393, %v394
    %v396 = vrot.slane %v395, 2
    %v397 = vadd.f32 %v395, %v396
    %v398 = vrot.slane %v397, 1
    %v399 = vadd.f32 %v397, %v398
    %s400 = vtos %v399
    %v401 = vadd.f32 %v349, %v352
    %402 = vadd.xlane.f32.xlu0 %v401
    %v403 = vpop.xlane.xlu0 %402
    %v404 = vrot.slane %v403, 4
    %v405 = vadd.f32 %v403, %v404
    %v406 = vrot.slane %v405, 2
    %v407 = vadd.f32 %v405, %v406
    %v408 = vrot.slane %v407, 1
    %v409 = vadd.f32 %v407, %v408
    %s410 = vtos %v409
    %v411 = vlaneseq
    %v412 = vand.u32 %v411, 127
    %vm413 = vcmp.eq.s32.totalorder %v412, 0
    %v414 = vstv %s380
    %v415 = vsel %vm413, %v414, 0.0
    %vm416 = vcmp.eq.s32.totalorder %v412, 1
    %v417 = vstv %s390
    %v418 = vsel %vm416, %v417, %v415
    %vm419 = vcmp.eq.s32.totalorder %v412, 2
    %v420 = vstv %s400
    %v421 = vsel %vm419, %v420, %v418
    %vm422 = vcmp.eq.s32.totalorder %v412, 3
    %v423 = vstv %s410
    %v424 = vsel %vm422, %v423, %v421
    %425 = vst [vmem:[#allocation13] sm:$0x1] %v424
    // Predicated region
    $region54: #{tpu_custom_call.1} parent=1 // pred_check
      _
    $region55: #{tpu_custom_call.1} parent=1 // pred_check_branch
      %427 = sbr.rel (0) target = $region57
    $region56: #{tpu_custom_call.1} parent=1 // pred_region
      %s429 = ssub.s32 16, 16
      %430 = vsyncadd [#allocation4], %s429
      %s432 = sshll.u32 [#allocation13], 4
      %s433 = int_to_ptr.vmem [resolvable:$true] %s432
      %435 = dma.vmem_to_hbm [thread:$0]  %s433, 16, %s7, [#allocation4]
    $region57: #{tpu_custom_call.1} parent=1 // pred_fallthru
      _
    // Predicated region
    $region58: #{tpu_custom_call.1} parent=1 // pred_check
      _
    $region59: #{tpu_custom_call.1} parent=1 // pred_check_branch
      %437 = sbr.rel (0) target = $region61
    $region60: #{tpu_custom_call.1} parent=1 // pred_region
      %438 = dma.done [#allocation4], 16
    $region61: #{tpu_custom_call.1} parent=1 // pred_fallthru
      _
    %439 = vsyncpa [#allocation3], 1
    %440 = vsyncpa [#allocation6], 1
    %441 = vsyncpa [#allocation9], 1
    %442 = vsyncpa [#allocation12], 1
    %443 = vsyncpa [#allocation4], 1

</llo_original>
